<compile_context>
chip_gen: v5e
topology: v5e:2x2
jax: 0.10.0
libtpu: 0.0.40
codegen_flags: <defaults>
</compile_context>

<pallas_src>
import jax
import jax.numpy as jnp
from jax.experimental import pallas as pl
from jax.experimental.pallas import tpu as pltpu


def _make_faf_kernel(bt):
    """Build the fused FAF kernel for a static batch-block of `bt` images."""

    def faf_kernel(x1_ref, x2_ref, w1a_ref, w1b_ref, w2_ref, b1_ref, b2_ref,
                   o_ref):
        """relu(W2 @ relu(W1 @ cat(x1,x2) + b1) + b2) on one (bt, T) slab.

        x1_ref:  (bt, C1, T)    spatial-on-lanes slab of x1
        x2_ref:  (bt, C2, T)    spatial-on-lanes slab of x2
        w1a_ref: (Cout, C1)     conv1 weight columns acting on x1
        w1b_ref: (Cout, C2)     conv1 weight columns acting on x2
        w2_ref:  (Cout, Cout)   conv2 weight
        b1_ref:  (Cout, 1)      conv1 bias (broadcast along lanes)
        b2_ref:  (Cout, 1)      conv2 bias
        o_ref:   (bt, Cout, T)
        """
        w1a = w1a_ref[...]
        w1b = w1b_ref[...]
        w2 = w2_ref[...]
        b1 = b1_ref[...]
        b2 = b2_ref[...]
        # bt is a small static int (capped at 8) -> bounded unroll of 2-D dots.
        for b in range(bt):
            x1 = x1_ref[b].astype(jnp.float32)
            x2 = x2_ref[b].astype(jnp.float32)
            # conv1 on the virtual concat (linearity, no cat materialized)
            h = jnp.dot(w1a, x1, preferred_element_type=jnp.float32)
            h = h + jnp.dot(w1b, x2, preferred_element_type=jnp.float32)
            h = jnp.maximum(h + b1, 0.0)                     # bias + ReLU
            # conv2 + bias + ReLU
            y = jnp.dot(w2, h, preferred_element_type=jnp.float32)
            y = jnp.maximum(y + b2, 0.0)
            o_ref[b] = y.astype(o_ref.dtype)

    return faf_kernel


def _vmem_budget_bytes():
    """Generation-aware VMEM budgets: (pipeline block budget, scoped limit)."""
    try:
        phys = int(pltpu.get_tpu_info().vmem_capacity_bytes)
    except Exception:  # interpret mode / older runtime: be conservative (v7x)
        phys = 64 << 20
    # Leave headroom below physical VMEM; double-buffered blocks use ~half of
    # the scoped limit.  v7x (64 MiB): limit 48 MiB, budget 24 MiB.
    # v5e/v6e (128 MiB): limit 96 MiB, budget 48 MiB.
    vmem_limit = min(phys * 3 // 4, 96 << 20)
    pipeline_budget = vmem_limit // 2
    return pipeline_budget, vmem_limit


def _choose_tiling(n, hw_pad, c_total, io_bytes, pipeline_budget, max_bt=8):
    """Pick (Bt, T): batch-block and 128-aligned spatial tile.

    Constraints: Bt divides n, T divides hw_pad and is a multiple of 128,
    double-buffered blocks fit `pipeline_budget`, >=2 grid steps if possible
    (so both v7x TensorCores get work), and Bt*T targets >=32K lanes to
    amortize per-step overhead on small images.
    """
    bytes_per_lane = 2 * io_bytes * c_total        # double-buffered in+out

    # Spatial tile: largest 128-multiple divisor of hw_pad within budget.
    t_cap = max(128, (pipeline_budget // bytes_per_lane) // 128 * 128)
    t = min(hw_pad, t_cap)
    t -= t % 128
    t = max(t, 128)
    while hw_pad % t:
        t -= 128

    # Batch blocking to amortize the ~0.35 us per-grid-step overhead.
    lanes_target = 32768
    bt = 1
    for d in range(1, min(n, max_bt) + 1):
        if n % d:
            continue
        if d * t * bytes_per_lane > pipeline_budget:
            break
        bt = d
        if d * t >= lanes_target:
            break

    # Keep >=2 grid steps for the two v7x TensorCores.
    if (n // bt) * (hw_pad // t) < 2:
        if bt > 1:
            for d in range(bt - 1, 0, -1):
                if n % d == 0:
                    bt = d
                    break
        elif hw_pad > 128 and hw_pad // t < 2:
            for cand in range(t - 128, 0, -128):
                if hw_pad % cand == 0:
                    t = cand
                    break
    return bt, t


def faf_forward(x1_nchw, x2_nchw, params, io_dtype=jnp.float32):
    """FAF forward. Inputs NCHW (PyTorch convention), output NCHW.

    io_dtype: dtype used for the HBM-resident activations (inputs/output).
    The kernel is HBM-bound, so io_dtype=jnp.bfloat16 gives ~2x end-to-end if
    accuracy allows; in-kernel math always accumulates in f32.
    """
    N, C1, H, W = x1_nchw.shape
    C2 = x2_nchw.shape[1]
    HW = H * W
    Cout, Cin = params["w1"].shape
    assert Cin == C1 + C2, "cat([x1, x2]) channel count must equal in_channels"
    assert params["w2"].shape == (Cout, Cout), \
        "FAF.forward requires conv2 in_channels == conv1 out_channels"

    # (N, C, H, W) -> (N, C, H*W): contiguous reshape, no data movement.
    x1f = x1_nchw.reshape(N, C1, HW).astype(io_dtype)
    x2f = x2_nchw.reshape(N, C2, HW).astype(io_dtype)

    # Pad H*W to a multiple of 128 so the output stays lane-dense (unmasked
    # vst); pad is sliced off after the call.
    hw_pad = ((HW + 127) // 128) * 128
    if hw_pad != HW:
        pad = ((0, 0), (0, 0), (0, hw_pad - HW))
        x1f = jnp.pad(x1f, pad)
        x2f = jnp.pad(x2f, pad)

    # Split conv1 weight columns so the concat never exists in HBM.
    w1a = params["w1"][:, :C1]
    w1b = params["w1"][:, C1:]
    w2 = params["w2"]
    b1 = params["b1"].reshape(Cout, 1)
    b2 = params["b2"].reshape(Cout, 1)

    pipeline_budget, vmem_limit = _vmem_budget_bytes()
    io_bytes = jnp.dtype(io_dtype).itemsize
    Bt, T = _choose_tiling(N, hw_pad, C1 + C2 + Cout, io_bytes,
                           pipeline_budget)
    grid = (N // Bt, hw_pad // T)

    out = pl.pallas_call(
        _make_faf_kernel(Bt),
        out_shape=jax.ShapeDtypeStruct((N, Cout, hw_pad), io_dtype),
        grid_spec=pltpu.PrefetchScalarGridSpec(
            num_scalar_prefetch=0,
            grid=grid,
            in_specs=[
                pl.BlockSpec((Bt, C1, T), lambda n, s: (n, 0, s)),
                pl.BlockSpec((Bt, C2, T), lambda n, s: (n, 0, s)),
                pl.BlockSpec((Cout, C1), lambda n, s: (0, 0)),
                pl.BlockSpec((Cout, C2), lambda n, s: (0, 0)),
                pl.BlockSpec((Cout, Cout), lambda n, s: (0, 0)),
                pl.BlockSpec((Cout, 1), lambda n, s: (0, 0)),
                pl.BlockSpec((Cout, 1), lambda n, s: (0, 0)),
            ],
            out_specs=pl.BlockSpec((Bt, Cout, T), lambda n, s: (n, 0, s)),
        ),
        compiler_params=pltpu.CompilerParams(
            dimension_semantics=("parallel", "parallel"),
            vmem_limit_bytes=int(vmem_limit)),
    )(x1f, x2f, w1a, w1b, w2, b1, b2)

    if hw_pad != HW:
        out = out[:, :, :HW]
    return out.reshape(N, Cout, H, W)


# ----------------- pure-JAX reference (for verification) -----------------
def faf_ref(x1_nchw, x2_nchw, params):
    x3 = jnp.concatenate([x1_nchw, x2_nchw], axis=1)                 # NCHW cat
    x4 = (jnp.einsum("oc,nchw->nohw", params["w1"], x3)
          + params["b1"][None, :, None, None])
    x5 = jnp.maximum(x4, 0.0)
    x6 = (jnp.einsum("oc,nchw->nohw", params["w2"], x5)
          + params["b2"][None, :, None, None])
    return jnp.maximum(x6, 0.0)


if __name__ == "__main__":
    # forward() requires out_channels == in_channels (conv2 consumes conv1's
    # output); choose in_ch = out_ch = 8, with x1/x2 contributing 4 each.
    N, C1, C2, H, W = 2, 4, 4, 16, 16
    Cin = C1 + C2
    Cout = Cin

    key = jax.random.PRNGKey(0)
    k1, k2, k3, k4, k5, k6 = jax.random.split(key, 6)

    params = {
        "w1": jax.random.normal(k1, (Cout, Cin), jnp.float32) * 0.2,
        "b1": jax.random.normal(k2, (Cout,), jnp.float32) * 0.1,
        "w2": jax.random.normal(k3, (Cout, Cout), jnp.float32) * 0.2,
        "b2": jax.random.normal(k4, (Cout,), jnp.float32) * 0.1,
    }

    x1 = jax.random.normal(k5, (N, C1, H, W), jnp.float32)   # NCHW, PyTorch-style
    x2 = jax.random.normal(k6, (N, C2, H, W), jnp.float32)

    out = jax.block_until_ready(faf_forward(x1, x2, params))
    ref = jax.block_until_ready(faf_ref(x1, x2, params))

    assert out.shape == (N, Cout, H, W), out.shape
    max_err = float(jnp.max(jnp.abs(out - ref)))
    assert jnp.allclose(out, ref, atol=1e-4, rtol=1e-4), max_err

    print("KERNEL_OK")
</pallas_src>

<mosaic_0001>
module attributes {stable_mosaic.version = 11 : i64} {
  func.func @faf_kernel(%arg0: i32, %arg1: i32, %arg2: memref<1x4x256xf32, #tpu.memory_space<vmem>>, %arg3: memref<1x4x256xf32, #tpu.memory_space<vmem>>, %arg4: memref<8x4xf32, #tpu.memory_space<vmem>>, %arg5: memref<8x4xf32, #tpu.memory_space<vmem>>, %arg6: memref<8x8xf32, #tpu.memory_space<vmem>>, %arg7: memref<8x1xf32, #tpu.memory_space<vmem>>, %arg8: memref<8x1xf32, #tpu.memory_space<vmem>>, %arg9: memref<1x8x256xf32, #tpu.memory_space<vmem>>) attributes {dimension_semantics = [#tpu.dimension_semantics<parallel>, #tpu.dimension_semantics<parallel>], iteration_bounds = array<i64: 2, 1>, scalar_prefetch = 0 : i64, scratch_operands = 0 : i64, tpu.core_type = #tpu.core_type<tc>, window_params = [{transform_indices = @transform_0, window_bounds = array<i64: 1, 4, 256>}, {transform_indices = @transform_1, window_bounds = array<i64: 1, 4, 256>}, {pipeline_mode = #tpu.pipeline_mode<synchronous>, transform_indices = @transform_2, window_bounds = array<i64: 8, 4>}, {pipeline_mode = #tpu.pipeline_mode<synchronous>, transform_indices = @transform_3, window_bounds = array<i64: 8, 4>}, {pipeline_mode = #tpu.pipeline_mode<synchronous>, transform_indices = @transform_4, window_bounds = array<i64: 8, 8>}, {pipeline_mode = #tpu.pipeline_mode<synchronous>, transform_indices = @transform_5, window_bounds = array<i64: 8, 1>}, {pipeline_mode = #tpu.pipeline_mode<synchronous>, transform_indices = @transform_6, window_bounds = array<i64: 8, 1>}, {transform_indices = @transform_7, window_bounds = array<i64: 1, 8, 256>}]} {
    %c0 = arith.constant 0 : index
    %c0_0 = arith.constant 0 : index
    %0 = vector.load %arg4[%c0, %c0_0] : memref<8x4xf32, #tpu.memory_space<vmem>>, vector<8x4xf32>
    %c0_1 = arith.constant 0 : index
    %c0_2 = arith.constant 0 : index
    %1 = vector.load %arg5[%c0_1, %c0_2] : memref<8x4xf32, #tpu.memory_space<vmem>>, vector<8x4xf32>
    %c0_3 = arith.constant 0 : index
    %c0_4 = arith.constant 0 : index
    %2 = vector.load %arg6[%c0_3, %c0_4] : memref<8x8xf32, #tpu.memory_space<vmem>>, vector<8x8xf32>
    %c0_5 = arith.constant 0 : index
    %c0_6 = arith.constant 0 : index
    %3 = vector.load %arg7[%c0_5, %c0_6] : memref<8x1xf32, #tpu.memory_space<vmem>>, vector<8x1xf32>
    %c0_7 = arith.constant 0 : index
    %c0_8 = arith.constant 0 : index
    %4 = vector.load %arg8[%c0_7, %c0_8] : memref<8x1xf32, #tpu.memory_space<vmem>>, vector<8x1xf32>
    %c0_9 = arith.constant 0 : index
    %c0_10 = arith.constant 0 : index
    %c0_11 = arith.constant 0 : index
    %5 = vector.load %arg2[%c0_9, %c0_10, %c0_11] : memref<1x4x256xf32, #tpu.memory_space<vmem>>, vector<1x4x256xf32>
    %6 = vector.shape_cast %5 : vector<1x4x256xf32> to vector<4x256xf32>
    %c0_12 = arith.constant 0 : index
    %c0_13 = arith.constant 0 : index
    %c0_14 = arith.constant 0 : index
    %7 = vector.load %arg3[%c0_12, %c0_13, %c0_14] : memref<1x4x256xf32, #tpu.memory_space<vmem>>, vector<1x4x256xf32>
    %8 = vector.shape_cast %7 : vector<1x4x256xf32> to vector<4x256xf32>
    %cst = arith.constant dense<0.000000e+00> : vector<8x256xf32>
    %9 = tpu.matmul %0, %6, %cst {dimension_numbers = #tpu.dot_dimension_numbers<[1], [0], [0], [1], [0, 0, 1, 1], [], []>} : vector<8x4xf32>, vector<4x256xf32>, vector<8x256xf32> -> vector<8x256xf32>
    %cst_15 = arith.constant dense<0.000000e+00> : vector<8x256xf32>
    %10 = tpu.matmul %1, %8, %cst_15 {dimension_numbers = #tpu.dot_dimension_numbers<[1], [0], [0], [1], [0, 0, 1, 1], [], []>} : vector<8x4xf32>, vector<4x256xf32>, vector<8x256xf32> -> vector<8x256xf32>
    %11 = arith.addf %9, %10 : vector<8x256xf32>
    %12 = vector.broadcast %3 : vector<8x1xf32> to vector<8x256xf32>
    %13 = arith.addf %11, %12 : vector<8x256xf32>
    %cst_16 = arith.constant 0.000000e+00 : f32
    %14 = vector.broadcast %cst_16 : f32 to vector<8x256xf32>
    %15 = arith.maximumf %13, %14 : vector<8x256xf32>
    %cst_17 = arith.constant dense<0.000000e+00> : vector<8x256xf32>
    %16 = tpu.matmul %2, %15, %cst_17 {dimension_numbers = #tpu.dot_dimension_numbers<[1], [0], [0], [1], [0, 0, 1, 1], [], []>} : vector<8x8xf32>, vector<8x256xf32>, vector<8x256xf32> -> vector<8x256xf32>
    %17 = vector.broadcast %4 : vector<8x1xf32> to vector<8x256xf32>
    %18 = arith.addf %16, %17 : vector<8x256xf32>
    %cst_18 = arith.constant 0.000000e+00 : f32
    %19 = vector.broadcast %cst_18 : f32 to vector<8x256xf32>
    %20 = arith.maximumf %18, %19 : vector<8x256xf32>
    %c0_19 = arith.constant 0 : index
    %c0_20 = arith.constant 0 : index
    %c0_21 = arith.constant 0 : index
    %21 = vector.load %arg9[%c0_19, %c0_20, %c0_21] : memref<1x8x256xf32, #tpu.memory_space<vmem>>, vector<1x8x256xf32>
    %22 = vector.shape_cast %21 : vector<1x8x256xf32> to vector<8x256xf32>
    %23 = vector.shape_cast %20 : vector<8x256xf32> to vector<1x8x256xf32>
    tpu.vector_store %arg9[%c0_19, %c0_20, %c0_21], %23 {strides = array<i32>} : memref<1x8x256xf32, #tpu.memory_space<vmem>>, vector<1x8x256xf32>,
    return
  }
  func.func @transform_0(%arg0: i32, %arg1: i32) -> (i32, i32, i32) {
    %c0_i32 = arith.constant 0 : i32
    %c0_i32_0 = arith.constant 0 : i32
    return %arg0, %c0_i32, %arg1 : i32, i32, i32
  }
  func.func @transform_1(%arg0: i32, %arg1: i32) -> (i32, i32, i32) {
    %c0_i32 = arith.constant 0 : i32
    %c0_i32_0 = arith.constant 0 : i32
    return %arg0, %c0_i32, %arg1 : i32, i32, i32
  }
  func.func @transform_2(%arg0: i32, %arg1: i32) -> (i32, i32) {
    %c0_i32 = arith.constant 0 : i32
    %c0_i32_0 = arith.constant 0 : i32
    %c0_i32_1 = arith.constant 0 : i32
    return %c0_i32, %c0_i32_0 : i32, i32
  }
  func.func @transform_3(%arg0: i32, %arg1: i32) -> (i32, i32) {
    %c0_i32 = arith.constant 0 : i32
    %c0_i32_0 = arith.constant 0 : i32
    %c0_i32_1 = arith.constant 0 : i32
    return %c0_i32, %c0_i32_0 : i32, i32
  }
  func.func @transform_4(%arg0: i32, %arg1: i32) -> (i32, i32) {
    %c0_i32 = arith.constant 0 : i32
    %c0_i32_0 = arith.constant 0 : i32
    %c0_i32_1 = arith.constant 0 : i32
    return %c0_i32, %c0_i32_0 : i32, i32
  }
  func.func @transform_5(%arg0: i32, %arg1: i32) -> (i32, i32) {
    %c0_i32 = arith.constant 0 : i32
    %c0_i32_0 = arith.constant 0 : i32
    %c0_i32_1 = arith.constant 0 : i32
    return %c0_i32, %c0_i32_0 : i32, i32
  }
  func.func @transform_6(%arg0: i32, %arg1: i32) -> (i32, i32) {
    %c0_i32 = arith.constant 0 : i32
    %c0_i32_0 = arith.constant 0 : i32
    %c0_i32_1 = arith.constant 0 : i32
    return %c0_i32, %c0_i32_0 : i32, i32
  }
  func.func @transform_7(%arg0: i32, %arg1: i32) -> (i32, i32, i32) {
    %c0_i32 = arith.constant 0 : i32
    %c0_i32_0 = arith.constant 0 : i32
    return %arg0, %c0_i32, %arg1 : i32, i32, i32
  }
}

</mosaic_0001>

<llo_original>
// kernel: tpu_custom_call.1
$region0: #{tpu_custom_call.1}
  #allocation0 [shape = 'u32[]', space=smem, size = 0x4, offset = 0x4, fixed_abs, tag = 'smem constant byte address 0x4 - core index']
  #allocation1 [shape = 'u32[72,128]{1,0:T(1,128)}', space=vmem, size = 0x9000, scoped, tag = 'internal scratch']
  %s0 = inlined_call_operand.vmem [shape: f32[2,4,256], index: 0, kind: input, shape index: {}]
  %s1 = inlined_call_operand.hbm [shape: f32[2,4,256], index: 1, kind: input, shape index: {}]
  %s2 = inlined_call_operand.vmem [shape: f32[8,4], index: 2, kind: input, shape index: {}]
  %s3 = inlined_call_operand.vmem [shape: f32[8,4], index: 3, kind: input, shape index: {}]
  %s4 = inlined_call_operand.vmem [shape: f32[8,8], index: 4, kind: input, shape index: {}]
  %s5 = inlined_call_operand.vmem [shape: f32[8,1], index: 5, kind: input, shape index: {}]
  %s6 = inlined_call_operand.vmem [shape: f32[8,1], index: 6, kind: input, shape index: {}]
  %s7 = inlined_call_operand.hbm [shape: f32[2,8,256], index: 7, kind: output, shape index: {}]
  %s8 = sld [smem:[#allocation0]]
  $region65: #{tpu_custom_call.1} parent=0
    _
  %s10 = ssub.s32 1, %s8
  %s11 = scalar_select 0, %s10, %s8
  $region1: #{tpu_custom_call.1} parent=0
    #allocation2 [shape = 'u8[8192]{0}', space=vmem, size = 0x2000, scoped, tag = 'input window, operand 1']
    #allocation3 [shape = 's32[2]{0}', space=sflag, size = 0x8, scoped, tag = 'scoped memory for tpu_custom_call.1']
    #allocation4 [shape = 's32[2]{0}', space=sflag, size = 0x8, scoped, tag = 'scoped memory for tpu_custom_call.1']
    #allocation5 [shape = 'u8[16384]{0}', space=vmem, size = 0x4000, scoped, tag = 'output window, operand 0']
    %12 = vsyncpa [#allocation3], 0
    %s13 = scalar_lea.sflag [#allocation3], 1
    %14 = vsyncpa %s13, 0
    %15 = vsyncpa [#allocation4], 0
    %s16 = scalar_lea.sflag [#allocation4], 1
    %17 = vsyncpa %s16, 0
    loop: start=0, step=1, limit=4
    $region2: #{tpu_custom_call.1} parent=1 // loop_pre_header
      _
    $region3: #{tpu_custom_call.1} parent=1 // loop_header
      %s19 = sphi 0, %s23
      %p20 = scmp.ge.s32.totalorder %s19, 4
      %s26 = sphi 0, %s38
      %s27 = sphi 0, %s34
      %s28 = sphi 0, %s26
      %s29 = sphi 0, %s27
      %s30 = sphi 0, %s28
      %s31 = sphi 0, %s29
      %s43 = sphi 0, %s45
      %s46 = sphi 0, %s43
      %s47 = sphi 0, %s46
      %s63 = sphi 0, %s47
      %s71 = sphi 0, %s73
      %s74 = sphi 0, %s71
      %s75 = sphi 0, %s74
      %s91 = sphi 0, %s75
      %s95 = sphi 0, %s95
      %s97 = sphi 0, %s95
      %s98 = sphi 0, %s97
      %s112 = sphi 0, %s98
      %s116 = sphi 0, %s116
      %s118 = sphi 0, %s116
      %s119 = sphi 0, %s118
      %s133 = sphi 0, %s119
      %s137 = sphi 0, %s137
      %s139 = sphi 0, %s137
      %s140 = sphi 0, %s139
      %s154 = sphi 0, %s140
      %s158 = sphi 0, %s158
      %s160 = sphi 0, %s158
      %s161 = sphi 0, %s160
      %s175 = sphi 0, %s161
      %s179 = sphi 0, %s179
      %s181 = sphi 0, %s179
      %s182 = sphi 0, %s181
      %s196 = sphi 0, %s182
      %s204 = sphi 0, %s206
      %s207 = sphi 0, %s204
      %s208 = sphi 0, %s207
      %s224 = sphi 0, %s208
    $region4: #{tpu_custom_call.1} parent=1 // loop_header_branch
      %22 = sbr.rel (%p20) target = $region8
    $region5: #{tpu_custom_call.1} parent=1 // loop_body
      %s24 = ssub.s32 %s19, 1
      %s25 = ssub.s32 %s19, 2
      %s32 = sadd.s32 1, %s27
      %p33 = scmp.ge.s32.totalorder %s32, 1
      %s34 = scalar_select %p33, 0, %s32
      %s35 = sadd.s32 1, %s26
      %s36 = scalar_select %p33, %s35, %s26
      %p37 = scmp.ge.s32.totalorder %s36, 2
      %s38 = scalar_select %p37, 0, %s36
      %s39 = ssub.s32 %s26, %s38
      %s40 = ssub.s32 %s27, %s34
      %s41 = sor.u32 %s39, %s40
      %p42 = scmp.eq.s32.totalorder %s41, 0
      %s44 = sadd.s32 %s43, 1
      %s45 = scalar_select %p42, %s43, %s44
      %p48 = pneg %p42
      %p49 = scmp.eq.s32.totalorder %s19, 1
      %p50 = por %p48, %p49
      %p51 = scmp.ne.s32.totalorder %s43, %s46
      %p52 = scmp.eq.s32.totalorder %s19, 0
      %p53 = por %p51, %p52
      %p54 = scmp.ne.s32.totalorder %s43, %s46
      %p55 = scmp.eq.s32.totalorder %s24, 1
      %p56 = por %p54, %p55
      %p57 = scmp.ne.s32.totalorder %s46, %s47
      %p58 = scmp.eq.s32.totalorder %s24, 0
      %p59 = por %p57, %p58
      %p60 = scmp.ne.s32.totalorder %s46, %s47
      %p61 = scmp.eq.s32.totalorder %s25, 1
      %p62 = por %p60, %p61
      %p64 = scmp.ne.s32.totalorder %s47, %s63
      %p65 = scmp.eq.s32.totalorder %s25, 0
      %p66 = por %p64, %p65
      %s67 = ssub.s32 %s26, %s38
      %s68 = ssub.s32 %s27, %s34
      %s69 = sor.u32 %s67, %s68
      %p70 = scmp.eq.s32.totalorder %s69, 0
      %s72 = sadd.s32 %s71, 1
      %s73 = scalar_select %p70, %s71, %s72
      %p76 = pneg %p70
      %p77 = scmp.eq.s32.totalorder %s19, 1
      %p78 = por %p76, %p77
      %p79 = scmp.ne.s32.totalorder %s71, %s74
      %p80 = scmp.eq.s32.totalorder %s19, 0
      %p81 = por %p79, %p80
      %p82 = scmp.ne.s32.totalorder %s71, %s74
      %p83 = scmp.eq.s32.totalorder %s24, 1
      %p84 = por %p82, %p83
      %p85 = scmp.ne.s32.totalorder %s74, %s75
      %p86 = scmp.eq.s32.totalorder %s24, 0
      %p87 = por %p85, %p86
      %p88 = scmp.ne.s32.totalorder %s74, %s75
      %p89 = scmp.eq.s32.totalorder %s25, 1
      %p90 = por %p88, %p89
      %p92 = scmp.ne.s32.totalorder %s75, %s91
      %p93 = scmp.eq.s32.totalorder %s25, 0
      %p94 = por %p92, %p93
      %s96 = sadd.s32 %s95, 1
      %p99 = scmp.eq.s32.totalorder %s19, 1
      %p100 = scmp.ne.s32.totalorder %s95, %s97
      %p101 = scmp.eq.s32.totalorder %s19, 0
      %p102 = por %p100, %p101
      %p103 = scmp.ne.s32.totalorder %s95, %s97
      %p104 = scmp.eq.s32.totalorder %s24, 1
      %p105 = por %p103, %p104
      %p106 = scmp.ne.s32.totalorder %s97, %s98
      %p107 = scmp.eq.s32.totalorder %s24, 0
      %p108 = por %p106, %p107
      %p109 = scmp.ne.s32.totalorder %s97, %s98
      %p110 = scmp.eq.s32.totalorder %s25, 1
      %p111 = por %p109, %p110
      %p113 = scmp.ne.s32.totalorder %s98, %s112
      %p114 = scmp.eq.s32.totalorder %s25, 0
      %p115 = por %p113, %p114
      %s117 = sadd.s32 %s116, 1
      %p120 = scmp.eq.s32.totalorder %s19, 1
      %p121 = scmp.ne.s32.totalorder %s116, %s118
      %p122 = scmp.eq.s32.totalorder %s19, 0
      %p123 = por %p121, %p122
      %p124 = scmp.ne.s32.totalorder %s116, %s118
      %p125 = scmp.eq.s32.totalorder %s24, 1
      %p126 = por %p124, %p125
      %p127 = scmp.ne.s32.totalorder %s118, %s119
      %p128 = scmp.eq.s32.totalorder %s24, 0
      %p129 = por %p127, %p128
      %p130 = scmp.ne.s32.totalorder %s118, %s119
      %p131 = scmp.eq.s32.totalorder %s25, 1
      %p132 = por %p130, %p131
      %p134 = scmp.ne.s32.totalorder %s119, %s133
      %p135 = scmp.eq.s32.totalorder %s25, 0
      %p136 = por %p134, %p135
      %s138 = sadd.s32 %s137, 1
      %p141 = scmp.eq.s32.totalorder %s19, 1
      %p142 = scmp.ne.s32.totalorder %s137, %s139
      %p143 = scmp.eq.s32.totalorder %s19, 0
      %p144 = por %p142, %p143
      %p145 = scmp.ne.s32.totalorder %s137, %s139
      %p146 = scmp.eq.s32.totalorder %s24, 1
      %p147 = por %p145, %p146
      %p148 = scmp.ne.s32.totalorder %s139, %s140
      %p149 = scmp.eq.s32.totalorder %s24, 0
      %p150 = por %p148, %p149
      %p151 = scmp.ne.s32.totalorder %s139, %s140
      %p152 = scmp.eq.s32.totalorder %s25, 1
      %p153 = por %p151, %p152
      %p155 = scmp.ne.s32.totalorder %s140, %s154
      %p156 = scmp.eq.s32.totalorder %s25, 0
      %p157 = por %p155, %p156
      %s159 = sadd.s32 %s158, 1
      %p162 = scmp.eq.s32.totalorder %s19, 1
      %p163 = scmp.ne.s32.totalorder %s158, %s160
      %p164 = scmp.eq.s32.totalorder %s19, 0
      %p165 = por %p163, %p164
      %p166 = scmp.ne.s32.totalorder %s158, %s160
      %p167 = scmp.eq.s32.totalorder %s24, 1
      %p168 = por %p166, %p167
      %p169 = scmp.ne.s32.totalorder %s160, %s161
      %p170 = scmp.eq.s32.totalorder %s24, 0
      %p171 = por %p169, %p170
      %p172 = scmp.ne.s32.totalorder %s160, %s161
      %p173 = scmp.eq.s32.totalorder %s25, 1
      %p174 = por %p172, %p173
      %p176 = scmp.ne.s32.totalorder %s161, %s175
      %p177 = scmp.eq.s32.totalorder %s25, 0
      %p178 = por %p176, %p177
      %s180 = sadd.s32 %s179, 1
      %p183 = scmp.eq.s32.totalorder %s19, 1
      %p184 = scmp.ne.s32.totalorder %s179, %s181
      %p185 = scmp.eq.s32.totalorder %s19, 0
      %p186 = por %p184, %p185
      %p187 = scmp.ne.s32.totalorder %s179, %s181
      %p188 = scmp.eq.s32.totalorder %s24, 1
      %p189 = por %p187, %p188
      %p190 = scmp.ne.s32.totalorder %s181, %s182
      %p191 = scmp.eq.s32.totalorder %s24, 0
      %p192 = por %p190, %p191
      %p193 = scmp.ne.s32.totalorder %s181, %s182
      %p194 = scmp.eq.s32.totalorder %s25, 1
      %p195 = por %p193, %p194
      %p197 = scmp.ne.s32.totalorder %s182, %s196
      %p198 = scmp.eq.s32.totalorder %s25, 0
      %p199 = por %p197, %p198
      %s200 = ssub.s32 %s26, %s38
      %s201 = ssub.s32 %s27, %s34
      %s202 = sor.u32 %s200, %s201
      %p203 = scmp.eq.s32.totalorder %s202, 0
      %s205 = sadd.s32 %s204, 1
      %s206 = scalar_select %p203, %s204, %s205
      %p209 = pneg %p203
      %p210 = scmp.eq.s32.totalorder %s19, 1
      %p211 = por %p209, %p210
      %p212 = scmp.ne.s32.totalorder %s204, %s207
      %p213 = scmp.eq.s32.totalorder %s19, 0
      %p214 = por %p212, %p213
      %p215 = scmp.ne.s32.totalorder %s204, %s207
      %p216 = scmp.eq.s32.totalorder %s24, 1
      %p217 = por %p215, %p216
      %p218 = scmp.ne.s32.totalorder %s207, %s208
      %p219 = scmp.eq.s32.totalorder %s24, 0
      %p220 = por %p218, %p219
      %p221 = scmp.ne.s32.totalorder %s207, %s208
      %p222 = scmp.eq.s32.totalorder %s25, 1
      %p223 = por %p221, %p222
      %p225 = scmp.ne.s32.totalorder %s208, %s224
      %p226 = scmp.eq.s32.totalorder %s25, 0
      %p227 = por %p225, %p226
      %p228 = scmp.le.s32.totalorder 1, %s19
      %p229 = scmp.lt.s32.totalorder %s19, 3
      %p230 = pnand %p228, %p229
      %p231 = pneg %p230
      // Predicated region
      $region9: #{tpu_custom_call.1} parent=5 // pred_check
        _
      $region10: #{tpu_custom_call.1} parent=5 // pred_check_branch
        %233 = sbr.rel (%p230) target = $region12
      $region11: #{tpu_custom_call.1} parent=5 // pred_region
        %s234 = ssub.s32 %s19, 1
        // Predicated region
        $region13: #{tpu_custom_call.1} parent=11 // pred_check
          %p235 = pneg %p108
        $region14: #{tpu_custom_call.1} parent=11 // pred_check_branch
          %237 = sbr.rel (%p235) target = $region16
        $region15: #{tpu_custom_call.1} parent=11 // pred_region
          _
        $region16: #{tpu_custom_call.1} parent=11 // pred_fallthru
          _
        // Predicated region
        $region17: #{tpu_custom_call.1} parent=11 // pred_check
          %p238 = pneg %p129
        $region18: #{tpu_custom_call.1} parent=11 // pred_check_branch
          %240 = sbr.rel (%p238) target = $region20
        $region19: #{tpu_custom_call.1} parent=11 // pred_region
          _
        $region20: #{tpu_custom_call.1} parent=11 // pred_fallthru
          _
        // Predicated region
        $region21: #{tpu_custom_call.1} parent=11 // pred_check
          %p241 = pneg %p150
        $region22: #{tpu_custom_call.1} parent=11 // pred_check_branch
          %243 = sbr.rel (%p241) target = $region24
        $region23: #{tpu_custom_call.1} parent=11 // pred_region
          _
        $region24: #{tpu_custom_call.1} parent=11 // pred_fallthru
          _
        // Predicated region
        $region25: #{tpu_custom_call.1} parent=11 // pred_check
          %p244 = pneg %p171
        $region26: #{tpu_custom_call.1} parent=11 // pred_check_branch
          %246 = sbr.rel (%p244) target = $region28
        $region27: #{tpu_custom_call.1} parent=11 // pred_region
          _
        $region28: #{tpu_custom_call.1} parent=11 // pred_fallthru
          _
        // Predicated region
        $region29: #{tpu_custom_call.1} parent=11 // pred_check
          %p247 = pneg %p192
        $region30: #{tpu_custom_call.1} parent=11 // pred_check_branch
          %249 = sbr.rel (%p247) target = $region32
        $region31: #{tpu_custom_call.1} parent=11 // pred_region
          _
        $region32: #{tpu_custom_call.1} parent=11 // pred_fallthru
          _
      $region12: #{tpu_custom_call.1} parent=5 // pred_fallthru
        _
      %p250 = scmp.lt.s32.totalorder %s19, 2
      // Predicated region
      $region33: #{tpu_custom_call.1} parent=5 // pred_check
        %p251 = pneg %p250
      $region34: #{tpu_custom_call.1} parent=5 // pred_check_branch
        %253 = sbr.rel (%p251) target = $region36
      $region35: #{tpu_custom_call.1} parent=5 // pred_region
        // Predicated region
        $region37: #{tpu_custom_call.1} parent=35 // pred_check
          %p254 = pneg %p53
        $region38: #{tpu_custom_call.1} parent=35 // pred_check_branch
          %256 = sbr.rel (%p254) target = $region40
        $region39: #{tpu_custom_call.1} parent=35 // pred_region
          %s257 = smul.u32 2, %s27
          %p258 = scmp.lt.s32.totalorder %s26, 1
          %s259 = scalar_select %p258, %s26, 1
          %p260 = scmp.lt.s32.totalorder %s257, 1
          %s261 = scalar_select %p260, %s257, 1
          %s262 = smul.addr %s259, 2
          %s263 = sadd.s32 %s261, %s262
          %s264 = smul.addr %s263, 4
          %s265 = scalar_lea.vmem %s0, %s264
          %s266 = smul.u32 2, %s27
        $region40: #{tpu_custom_call.1} parent=35 // pred_fallthru
          _
        // Predicated region
        $region41: #{tpu_custom_call.1} parent=35 // pred_check
          %p267 = pneg %p81
        $region42: #{tpu_custom_call.1} parent=35 // pred_check_branch
          %269 = sbr.rel (%p267) target = $region44
        $region43: #{tpu_custom_call.1} parent=35 // pred_region
          %s270 = sand.u32 %s71, 1
          %s271 = scalar_lea.sflag [#allocation3], %s270
          %s272 = sand.u32 %s71, 1
          %s273 = smul.addr %s272, 8
          %s274 = scalar_lea.vmem [#allocation2], %s273
          %s275 = smul.u32 2, %s27
          %277 = vsyncadd %s271, 0
          %s278 = smul.addr %s26, 2
          %s279 = sadd.s32 %s275, %s278
          %s280 = smul.addr %s279, 4
          %s281 = scalar_lea.hbm %s1, %s280
          %s283 = sshll.u32 %s281, 4
          %s284 = int_to_ptr.hbm [resolvable:$true] %s283
          %s285 = sshll.u32 %s274, 4
          %s286 = int_to_ptr.vmem [resolvable:$true] %s285
          %288 = dma.hbm_to_vmem [thread:$0]  %s284, 128, %s286, %s271
        $region44: #{tpu_custom_call.1} parent=35 // pred_fallthru
          _
      $region36: #{tpu_custom_call.1} parent=5 // pred_fallthru
        _
      %p289 = scmp.le.s32.totalorder 1, %s19
      %p290 = scmp.lt.s32.totalorder %s19, 3
      %p291 = pnand %p289, %p290
      %p292 = pneg %p291
      // Predicated region
      $region45: #{tpu_custom_call.1} parent=5 // pred_check
        _
      $region46: #{tpu_custom_call.1} parent=5 // pred_check_branch
        %294 = sbr.rel (%p291) target = $region48
      $region47: #{tpu_custom_call.1} parent=5 // pred_region
        %s295 = ssub.s32 %s19, 1
        %s296 = sand.u32 %s74, 1
        %s297 = scalar_lea.sflag [#allocation3], %s296
        %s298 = sand.u32 %s74, 1
        %s299 = smul.addr %s298, 8
        %s300 = scalar_lea.vmem [#allocation2], %s299
        // Predicated region
        $region49: #{tpu_custom_call.1} parent=47 // pred_check
          %p301 = pneg %p87
        $region50: #{tpu_custom_call.1} parent=47 // pred_check_branch
          %303 = sbr.rel (%p301) target = $region52
        $region51: #{tpu_custom_call.1} parent=47 // pred_region
          %305 = dma.done %s297, 128
        $region52: #{tpu_custom_call.1} parent=47 // pred_fallthru
          _
        %s306 = smul.u32 2, %s29
        %p307 = scmp.lt.s32.totalorder %s28, 1
        %s308 = scalar_select %p307, %s28, 1
        %p309 = scmp.lt.s32.totalorder %s306, 1
        %s310 = scalar_select %p309, %s306, 1
        %s311 = smul.addr %s308, 2
        %s312 = sadd.s32 %s310, %s311
        %s313 = smul.addr %s312, 4
        %s314 = scalar_lea.vmem %s0, %s313
        %p315 = pneg %p59
        %p316 = pneg %p56
        %s317 = sand.u32 %s74, 1
        %s318 = scalar_lea.sflag [#allocation3], %s317
        %s319 = sand.u32 %s74, 1
        %s320 = smul.addr %s319, 8
        %s321 = scalar_lea.vmem [#allocation2], %s320
        %p322 = pneg %p87
        %p323 = pneg %p84
        %p324 = pneg %p108
        %p325 = pneg %p105
        %p326 = pneg %p129
        %p327 = pneg %p126
        %p328 = pneg %p150
        %p329 = pneg %p147
        %p330 = pneg %p171
        %p331 = pneg %p168
        %p332 = pneg %p192
        %p333 = pneg %p189
        %p334 = pneg %p220
        %p335 = pneg %p217
        %s336 = sand.u32 %s207, 1
        %s337 = scalar_lea.sflag [#allocation4], %s336
        %s338 = sand.u32 %s207, 1
        %s339 = smul.addr %s338, 16
        %s340 = scalar_lea.vmem [#allocation5], %s339
        %s341 = smul.u32 2, %s29
        %p342 = scmp.lt.s32.totalorder %s28, 1
        %s343 = scalar_select %p342, %s28, 1
        %p344 = scmp.lt.s32.totalorder %s341, 1
        %s345 = scalar_select %p344, %s341, 1
        %s346 = smul.addr %s343, 2
        %s347 = sadd.s32 %s345, %s346
        %s348 = smul.addr %s347, 4
        %s349 = scalar_lea.vmem %s0, %s348
        %s350 = smul.u32 2, %s29
        %s351 = smul.u32 2, %s29
        %s352 = smul.u32 2, %s29
        %v353 = vld [vmem:[%s2] sm:$0xff]
        %v354 = vld [vmem:[%s3] sm:$0xff]
        %v355 = vld [vmem:[%s4] sm:$0xff]
        %v356 = vld [vmem:[%s5] sm:$0xff]
        %v357 = vld [vmem:[%s6] sm:$0xff]
        %v358 = vld [vmem:[%s349] sm:$0xff]
        %v359 = vld [vmem:[%s300] sm:$0xff]
        %361 = vst [vmem:[#allocation1] ss:$2 sm:$0xff] %v359
        %v362 = vld.sshfl [vmem:[#allocation1] sm:$0xff pattern:$0x75316420]
        %v363 = vld.sshfl [vmem:[#allocation1 + $0x8] sm:$0xff pattern:$0x75316420]
        %vm364 = vcmask 31744
        %v366 = vsel %vm364, %v354, 0
        %vm368 = vcmask 1043456
        %v369 = vsel %vm368, %v362, 0
        %v371 = vsel %vm368, %v363, 0
        %373 = vmatpush.msra.mxu0 0.0
        %374 = vmatpush.msra.mxu0 0.0
        %375 = vmatpush.msra.mxu0 0.0
        %376 = vmatpush.msra.mxu0 0.0
        %377 = vmatpush.msra.mxu0 0.0
        %378 = vmatpush.msra.mxu0 0.0
        %379 = vmatpush.msra.mxu0 0.0
        %380 = vmatpush.msra.mxu0 0.0
        %381 = vmatpush.msra.mxu0 0.0
        %382 = vmatpush.msra.mxu0 0.0
        %383 = vmatpush.msra.mxu0 0.0
        %384 = vmatpush.msra.mxu0 0.0
        %385 = vmatpush.msra.mxu0 0.0
        %386 = vmatpush.msra.mxu0 0.0
        %387 = vmatpush.msra.mxu0 0.0
        %388 = vmatpush.msra.mxu0 %v369
        %389 = vmatmul.f32.gmra.mxu0 %v366
        %v390 = vpop.f32.mrf.mxu0
        %v391 = vadd.f32 0.0, %v390
        %392 = vdwg.mxu0
        %393 = vmatpush.msra.mxu0 0.0
        %394 = vmatpush.msra.mxu0 0.0
        %395 = vmatpush.msra.mxu0 0.0
        %396 = vmatpush.msra.mxu0 0.0
        %397 = vmatpush.msra.mxu0 0.0
        %398 = vmatpush.msra.mxu0 0.0
        %399 = vmatpush.msra.mxu0 0.0
        %400 = vmatpush.msra.mxu0 0.0
        %401 = vmatpush.msra.mxu0 0.0
        %402 = vmatpush.msra.mxu0 0.0
        %403 = vmatpush.msra.mxu0 0.0
        %404 = vmatpush.msra.mxu0 0.0
        %405 = vmatpush.msra.mxu0 0.0
        %406 = vmatpush.msra.mxu0 0.0
        %407 = vmatpush.msra.mxu0 0.0
        %408 = vmatpush.msra.mxu0 %v371
        %409 = vmatmul.f32.gmra.mxu0 %v366
        %v410 = vpop.f32.mrf.mxu0
        %v411 = vadd.f32 0.0, %v410
        %412 = vdwg.mxu0
        %414 = vst [vmem:[#allocation1] ss:$2 sm:$0xff] %v358
        %v415 = vld.sshfl [vmem:[#allocation1] sm:$0xff pattern:$0x75316420]
        %v416 = vld.sshfl [vmem:[#allocation1 + $0x8] sm:$0xff pattern:$0x75316420]
        %v418 = vsel %vm364, %v353, 0
        %v420 = vsel %vm368, %v415, 0
        %v422 = vsel %vm368, %v416, 0
        %424 = vmatpush.msra.mxu0 0.0
        %425 = vmatpush.msra.mxu0 0.0
        %426 = vmatpush.msra.mxu0 0.0
        %427 = vmatpush.msra.mxu0 0.0
        %428 = vmatpush.msra.mxu0 0.0
        %429 = vmatpush.msra.mxu0 0.0
        %430 = vmatpush.msra.mxu0 0.0
        %431 = vmatpush.msra.mxu0 0.0
        %432 = vmatpush.msra.mxu0 0.0
        %433 = vmatpush.msra.mxu0 0.0
        %434 = vmatpush.msra.mxu0 0.0
        %435 = vmatpush.msra.mxu0 0.0
        %436 = vmatpush.msra.mxu0 0.0
        %437 = vmatpush.msra.mxu0 0.0
        %438 = vmatpush.msra.mxu0 0.0
        %439 = vmatpush.msra.mxu0 %v420
        %440 = vmatmul.f32.gmra.mxu0 %v418
        %v441 = vpop.f32.mrf.mxu0
        %v442 = vadd.f32 %v391, %v441
        %443 = vdwg.mxu0
        %444 = vmatpush.msra.mxu0 0.0
        %445 = vmatpush.msra.mxu0 0.0
        %446 = vmatpush.msra.mxu0 0.0
        %447 = vmatpush.msra.mxu0 0.0
        %448 = vmatpush.msra.mxu0 0.0
        %449 = vmatpush.msra.mxu0 0.0
        %450 = vmatpush.msra.mxu0 0.0
        %451 = vmatpush.msra.mxu0 0.0
        %452 = vmatpush.msra.mxu0 0.0
        %453 = vmatpush.msra.mxu0 0.0
        %454 = vmatpush.msra.mxu0 0.0
        %455 = vmatpush.msra.mxu0 0.0
        %456 = vmatpush.msra.mxu0 0.0
        %457 = vmatpush.msra.mxu0 0.0
        %458 = vmatpush.msra.mxu0 0.0
        %459 = vmatpush.msra.mxu0 %v422
        %460 = vmatmul.f32.gmra.mxu0 %v418
        %v461 = vpop.f32.mrf.mxu0
        %v462 = vadd.f32 %v411, %v461
        %463 = vdwg.mxu0
        %465 = vset.pattern.permute.xlu0 0
        %466 = vperm.xlu0 %465, %v356
        %v467 = vpop.permute.xlu0 %466
        %v469 = vadd.f32 %v442, %v467
        %v470 = vadd.f32 %v462, %v467
        %v471 = vmax.f32 %v469, 0.0
        %v472 = vmax.f32 %v470, 0.0
        %474 = vset.pattern.permute.xlu0 0
        %475 = vperm.xlu0 %474, %v357
        %v476 = vpop.permute.xlu0 %475
        %vm478 = vcmask 64512
        %v480 = vsel %vm478, %v355, 0
        %482 = vmatpush.msra.mxu0 0.0
        %483 = vmatpush.msra.mxu0 0.0
        %484 = vmatpush.msra.mxu0 0.0
        %485 = vmatpush.msra.mxu0 0.0
        %486 = vmatpush.msra.mxu0 0.0
        %487 = vmatpush.msra.mxu0 0.0
        %488 = vmatpush.msra.mxu0 0.0
        %489 = vmatpush.msra.mxu0 0.0
        %490 = vmatpush.msra.mxu0 0.0
        %491 = vmatpush.msra.mxu0 0.0
        %492 = vmatpush.msra.mxu0 0.0
        %493 = vmatpush.msra.mxu0 0.0
        %494 = vmatpush.msra.mxu0 0.0
        %495 = vmatpush.msra.mxu0 0.0
        %496 = vmatpush.msra.mxu0 0.0
        %497 = vmatpush.msra.mxu0 %v471
        %498 = vmatmul.f32.gmra.mxu0 %v480
        %v499 = vpop.f32.mrf.mxu0
        %v500 = vadd.f32 %v476, %v499
        %501 = vdwg.mxu0
        %502 = vmatpush.msra.mxu0 0.0
        %503 = vmatpush.msra.mxu0 0.0
        %504 = vmatpush.msra.mxu0 0.0
        %505 = vmatpush.msra.mxu0 0.0
        %506 = vmatpush.msra.mxu0 0.0
        %507 = vmatpush.msra.mxu0 0.0
        %508 = vmatpush.msra.mxu0 0.0
        %509 = vmatpush.msra.mxu0 0.0
        %510 = vmatpush.msra.mxu0 0.0
        %511 = vmatpush.msra.mxu0 0.0
        %512 = vmatpush.msra.mxu0 0.0
        %513 = vmatpush.msra.mxu0 0.0
        %514 = vmatpush.msra.mxu0 0.0
        %515 = vmatpush.msra.mxu0 0.0
        %516 = vmatpush.msra.mxu0 0.0
        %517 = vmatpush.msra.mxu0 %v472
        %518 = vmatmul.f32.gmra.mxu0 %v480
        %v519 = vpop.f32.mrf.mxu0
        %v520 = vadd.f32 %v476, %v519
        %521 = vdwg.mxu0
        %v522 = vmax.f32 %v500, 0.0
        %v523 = vmax.f32 %v520, 0.0
        %524 = vst [vmem:[%s340] sm:$0xff] %v522
        %525 = vst [vmem:[%s340 + $0x8] sm:$0xff] %v523
        %s526 = sand.u32 %s207, 1
        %s527 = scalar_lea.sflag [#allocation4], %s526
        %s528 = sand.u32 %s207, 1
        %s529 = smul.addr %s528, 16
        %s530 = scalar_lea.vmem [#allocation5], %s529
        // Predicated region
        $region53: #{tpu_custom_call.1} parent=47 // pred_check
          %p531 = pneg %p217
        $region54: #{tpu_custom_call.1} parent=47 // pred_check_branch
          %533 = sbr.rel (%p531) target = $region56
        $region55: #{tpu_custom_call.1} parent=47 // pred_region
          %s534 = smul.u32 2, %s29
          %536 = vsyncadd %s527, 0
          %s537 = smul.addr %s28, 2
          %s538 = sadd.s32 %s534, %s537
          %s539 = smul.addr %s538, 8
          %s540 = scalar_lea.hbm %s7, %s539
          %s542 = sshll.u32 %s530, 4
          %s543 = int_to_ptr.vmem [resolvable:$true] %s542
          %s544 = sshll.u32 %s540, 4
          %s545 = int_to_ptr.hbm [resolvable:$true] %s544
          %547 = dma.vmem_to_hbm [thread:$0]  %s543, 256, %s545, %s527
        $region56: #{tpu_custom_call.1} parent=47 // pred_fallthru
          _
      $region48: #{tpu_custom_call.1} parent=5 // pred_fallthru
        _
      %p548 = scmp.le.s32.totalorder 2, %s19
      // Predicated region
      $region57: #{tpu_custom_call.1} parent=5 // pred_check
        %p549 = pneg %p548
      $region58: #{tpu_custom_call.1} parent=5 // pred_check_branch
        %551 = sbr.rel (%p549) target = $region60
      $region59: #{tpu_custom_call.1} parent=5 // pred_region
        %s552 = ssub.s32 %s19, 2
        // Predicated region
        $region61: #{tpu_custom_call.1} parent=59 // pred_check
          %p553 = pneg %p223
        $region62: #{tpu_custom_call.1} parent=59 // pred_check_branch
          %555 = sbr.rel (%p553) target = $region64
        $region63: #{tpu_custom_call.1} parent=59 // pred_region
          %s556 = sand.u32 %s208, 1
          %s557 = scalar_lea.sflag [#allocation4], %s556
          %s558 = sand.u32 %s208, 1
          %s559 = smul.addr %s558, 16
          %s560 = scalar_lea.vmem [#allocation5], %s559
          %562 = dma.done %s557, 256
        $region64: #{tpu_custom_call.1} parent=59 // pred_fallthru
          _
      $region60: #{tpu_custom_call.1} parent=5 // pred_fallthru
        _
    $region6: #{tpu_custom_call.1} parent=1 // loop_footer
      %s23 = sadd.s32 1, %s19
    $region7: #{tpu_custom_call.1} parent=1 // loop_footer_branch
      %18 = sbr.rel target = $region3
    $region8: #{tpu_custom_call.1} parent=1 // loop_exit
      _
    %563 = vsyncpa [#allocation3], 1
    %s564 = scalar_lea.sflag [#allocation3], 1
    %565 = vsyncpa %s564, 1
    %566 = vsyncpa [#allocation4], 1
    %s567 = scalar_lea.sflag [#allocation4], 1
    %568 = vsyncpa %s567, 1

</llo_original>
